<compile_context>
chip_gen: v7x
topology: tpu7x:2x2x1
jax: 0.10.0
libtpu: 0.0.40
codegen_flags: <defaults>
</compile_context>

<pallas_src>
import functools

import jax
import jax.numpy as jnp
import numpy as np
from jax.experimental import pallas as pl
from jax.experimental.pallas import tpu as pltpu

_VMEM_BUDGET_BYTES = 12 * 1024 * 1024   # stay under v5e's 16 MiB scoped-VMEM default
_RESIDENT_W_BYTES = 8 * 1024 * 1024     # keep W^T fully resident below this size


def _round_up(n, m):
    return ((n + m - 1) // m) * m


def _hash_u32(x):
    """lowbias32 integer hash (uint32 -> uint32); plain VPU integer ops."""
    x = x ^ (x >> jnp.uint32(16))
    x = x * jnp.uint32(0x7FEB352D)
    x = x ^ (x >> jnp.uint32(15))
    x = x * jnp.uint32(0x846CA68B)
    x = x ^ (x >> jnp.uint32(16))
    return x


def _decoder_block_kernel(seed_ref, x_ref, w_ref, b_ref, o_ref, *,
                          negative_slope, keep_threshold, inv_keep,
                          matmul_dtype, use_hw_prng, tm, tn, col_shift):
    # x_ref: (tm, in_dim) f32; w_ref: (in_dim, tn) pre-transposed (bf16 by default);
    # b_ref: (1, tn) f32; o_ref: (tm, tn).
    x = x_ref[...].astype(matmul_dtype)      # bf16 operands feed the MXU at full rate
    w = w_ref[...]
    y = jnp.dot(x, w, preferred_element_type=jnp.float32)   # f32 accumulate
    y = y + b_ref[...].astype(jnp.float32)

    # LeakyReLU(negative_slope)
    y = jnp.where(y > 0, y, jnp.float32(negative_slope) * y)

    if keep_threshold is not None:
        # Inverted dropout (training): keep iff bits < keep_threshold, scale by 1/(1-p).
        i = pl.program_id(0)
        j = pl.program_id(1)
        if use_hw_prng:
            # Hardware PRNG path (real TPU only).
            pltpu.prng_seed(seed_ref[0], i, j)
            bits = pltpu.bitcast(pltpu.prng_random_bits(y.shape), jnp.uint32)
        else:
            # Stateless hash of the global element index.  Index math uses a
            # power-of-2 virtual stride -> shift/or, no per-element uint32 multiply.
            seed = seed_ref[0].astype(jnp.uint32) * jnp.uint32(0x9E3779B1)
            row = jax.lax.broadcasted_iota(jnp.int32, y.shape, 0).astype(jnp.uint32)
            col = jax.lax.broadcasted_iota(jnp.int32, y.shape, 1).astype(jnp.uint32)
            row_g = (i * tm).astype(jnp.uint32) + row
            col_g = (j * tn).astype(jnp.uint32) + col
            gidx = (row_g << jnp.uint32(col_shift)) | col_g
            bits = _hash_u32(gidx ^ seed)
        keep = bits < jnp.uint32(keep_threshold)
        y = jnp.where(keep, y * jnp.float32(inv_keep), jnp.float32(0.0))

    o_ref[...] = y.astype(o_ref.dtype)


def prepare_decoder_params(weight, bias, matmul_dtype=jnp.bfloat16):
    """One-time layout work for the Linear parameters (transpose + zero-pad + cast).

    weight: (out_dim, in_dim)  [PyTorch layout];  bias: (out_dim,).
    Hoisted out of the forward call so it is paid once per parameter, not per step.
    """
    out_dim, in_dim = weight.shape
    w_itemsize = jnp.dtype(matmul_dtype).itemsize
    out_pad128 = _round_up(out_dim, 128)
    if in_dim * out_pad128 * w_itemsize <= _RESIDENT_W_BYTES:
        tn = out_pad128            # whole W^T resident in VMEM (single-buffered)
    else:
        tn = 512                   # stream N tiles (full 256-wide MXU tiles on v6e/v7x)
    out_pad = _round_up(out_dim, tn)

    w_t = (jnp.zeros((in_dim, out_pad), matmul_dtype)
           .at[:, :out_dim].set(weight.T.astype(matmul_dtype)))
    b2d = (jnp.zeros((1, out_pad), jnp.float32)
           .at[:, :out_dim].set(bias.astype(jnp.float32)))
    return {"w_t": w_t, "b2d": b2d, "out_dim": out_dim, "tn": tn}


def decoder_block_apply(x, params, *, do_rate=0.1, negative_slope=0.2,
                        training=False, seed=0, tm=512, use_hw_prng=False):
    """Forward pass: Linear -> LeakyReLU(0.2) -> Dropout(do_rate).  x: (B, in_dim)."""
    B, in_dim = x.shape
    w_t, b2d = params["w_t"], params["b2d"]
    out_dim, tn = params["out_dim"], params["tn"]
    out_pad = w_t.shape[1]
    n_j = out_pad // tn
    matmul_dtype = w_t.dtype
    w_itemsize = jnp.dtype(matmul_dtype).itemsize
    x_itemsize = jnp.dtype(x.dtype).itemsize
    w_bufs = 1 if n_j == 1 else 2

    # ---- row-tile selection ----
    b8 = _round_up(B, 8)
    tm = max(8, (min(int(tm), b8) // 8) * 8)
    if b8 >= 16:
        # >= 2 steps on the parallel batch axis so v7x's two TensorCores share work.
        tm = min(tm, _round_up(pl.cdiv(b8, 2), 8))
    # Prefer a tile that divides the batch (avoids padding x with dead rows).
    for cand in range(tm, tm // 2 - 1, -8):
        if cand >= 8 and b8 % cand == 0:
            tm = cand
            break

    # Keep the per-step working set under the smallest (v5e) scoped-VMEM default.
    def _vmem_bytes(tm_):
        return (2 * tm_ * in_dim * x_itemsize          # x tile (double-buffered)
                + w_bufs * in_dim * tn * w_itemsize    # weight tile(s)
                + w_bufs * tn * 4                      # bias tile(s)
                + 2 * tm_ * tn * x_itemsize)           # out tile (double-buffered)
    while tm > 8 and _vmem_bytes(tm) > _VMEM_BUDGET_BYTES:
        tm = max(8, ((tm // 2) // 8) * 8)

    b_pad = _round_up(b8, tm)
    n_i = b_pad // tm

    xp = x if b_pad == B else jnp.pad(x, ((0, b_pad - B), (0, 0)))
    seed_arr = jnp.asarray([seed], dtype=jnp.int32)

    # ---- dropout constants ----
    apply_dropout = training and do_rate > 0.0
    keep_threshold = None
    inv_keep = 1.0
    if apply_dropout:
        keep_prob = 1.0 - float(do_rate)
        keep_threshold = min(int(round(keep_prob * 2.0 ** 32)), 2 ** 32 - 1)
        inv_keep = (1.0 / keep_prob) if keep_prob > 0.0 else 0.0
    col_shift = (int(out_pad) - 1).bit_length()        # power-of-2 virtual stride

    kernel = functools.partial(
        _decoder_block_kernel,
        negative_slope=float(negative_slope),
        keep_threshold=keep_threshold,
        inv_keep=inv_keep,
        matmul_dtype=matmul_dtype,
        use_hw_prng=bool(use_hw_prng),
        tm=tm, tn=tn, col_shift=col_shift)

    cost = pl.CostEstimate(
        flops=int(2 * b_pad * in_dim * out_pad),
        transcendentals=0,
        bytes_accessed=int(b_pad * in_dim * x_itemsize
                           + in_dim * out_pad * w_itemsize
                           + out_pad * 4
                           + b_pad * out_pad * x_itemsize))

    def _run(single_buffer_invariants):
        if single_buffer_invariants:
            # Grid-invariant W / bias: a single VMEM buffer is enough.
            w_spec = pl.BlockSpec((in_dim, tn), lambda i, j, s: (0, j),
                                  pipeline_mode=pl.Buffered(1))
            b_spec = pl.BlockSpec((1, tn), lambda i, j, s: (0, j),
                                  pipeline_mode=pl.Buffered(1))
        else:
            w_spec = pl.BlockSpec((in_dim, tn), lambda i, j, s: (0, j))
            b_spec = pl.BlockSpec((1, tn), lambda i, j, s: (0, j))

        grid_spec = pltpu.PrefetchScalarGridSpec(
            num_scalar_prefetch=1,
            grid=(n_i, n_j),
            in_specs=[
                pl.BlockSpec((tm, in_dim), lambda i, j, s: (i, 0)),   # x tile
                w_spec,                                               # W^T tile
                b_spec,                                               # bias tile
            ],
            out_specs=pl.BlockSpec((tm, tn), lambda i, j, s: (i, j)),
        )
        return pl.pallas_call(
            kernel,
            out_shape=jax.ShapeDtypeStruct((b_pad, out_pad), x.dtype),
            grid_spec=grid_spec,
            compiler_params=pltpu.CompilerParams(
                dimension_semantics=("parallel", "parallel")),
            cost_estimate=cost,
        )(seed_arr, xp, w_t, b2d)

    if n_j == 1:
        try:
            out = _run(True)
        except Exception:   # fallback for jax builds that reject single-buffering
            out = _run(False)
    else:
        out = _run(False)

    # NOTE: when out_dim << 128 the kernel writes padded lanes and this slice copies
    # the output once more; accepted knowingly (lane-dense stores win for real sizes).
    return out[:B, :out_dim]


def decoder_block(x, weight, bias, **kwargs):
    """Convenience wrapper taking PyTorch-layout (out_dim, in_dim) weight.
    Prefer prepare_decoder_params() once + decoder_block_apply() per step so the
    transpose/pad/cast is not paid on every forward call."""
    matmul_dtype = kwargs.pop("matmul_dtype", jnp.bfloat16)
    params = prepare_decoder_params(weight, bias, matmul_dtype=matmul_dtype)
    return decoder_block_apply(x, params, **kwargs)


if __name__ == "__main__":
    # Small shapes implied by the module: (batch, in_dim) -> (batch, out_dim)
    B, in_dim, out_dim = 16, 32, 16
    do_rate = 0.1

    key = jax.random.PRNGKey(0)
    kx, kw, kb = jax.random.split(key, 3)

    x = jax.random.normal(kx, (B, in_dim), dtype=jnp.float32)
    # Deterministic init mimicking nn.Linear's uniform(-1/sqrt(in), 1/sqrt(in))
    bound = 1.0 / np.sqrt(in_dim)
    weight = jax.random.uniform(kw, (out_dim, in_dim), jnp.float32, -bound, bound)
    bias = jax.random.uniform(kb, (out_dim,), jnp.float32, -bound, bound)

    # One-time parameter layout (transpose + pad + bf16 cast), hoisted out of forward.
    params = prepare_decoder_params(weight, bias)

    # Eval-mode forward (Dropout is identity in eval).
    out = jax.block_until_ready(
        decoder_block_apply(x, params, do_rate=do_rate, training=False))

    # Host f32 reference; loose tolerance covers the bf16 MXU operands.
    ref = np.asarray(x) @ np.asarray(weight).T + np.asarray(bias)
    ref = np.where(ref > 0, ref, 0.2 * ref).astype(np.float32)
    np.testing.assert_allclose(np.asarray(out), ref, rtol=2e-2, atol=3e-2)

    # Training (dropout) path: every output is either 0 (dropped) or ~ref/(1-p) (kept).
    out_train = jax.block_until_ready(
        decoder_block_apply(x, params, do_rate=do_rate, training=True, seed=123))
    assert out_train.shape == (B, out_dim)
    ot = np.asarray(out_train)
    scaled_ref = ref / (1.0 - do_rate)
    dropped = np.isclose(ot, 0.0, atol=1e-6)
    kept = np.isclose(ot, scaled_ref, rtol=2e-2, atol=4e-2)
    assert np.all(dropped | kept)

    print("KERNEL_OK")
</pallas_src>

<mosaic_0001>
module attributes {stable_mosaic.version = 11 : i64} {
  func.func @_decoder_block_kernel(%arg0: i32, %arg1: i32, %arg2: memref<1xi32, #tpu.memory_space<smem>>, %arg3: memref<8x32xf32, #tpu.memory_space<vmem>>, %arg4: memref<32x128xbf16, #tpu.memory_space<vmem>>, %arg5: memref<1x128xf32, #tpu.memory_space<vmem>>, %arg6: memref<8x128xf32, #tpu.memory_space<vmem>>) attributes {dimension_semantics = [#tpu.dimension_semantics<parallel>, #tpu.dimension_semantics<parallel>], iteration_bounds = array<i64: 2, 1>, scalar_prefetch = 1 : i64, scratch_operands = 0 : i64, tpu.core_type = #tpu.core_type<tc>, window_params = [{transform_indices = @transform_0, window_bounds = array<i64: 8, 32>}, {pipeline_mode = #tpu.pipeline_mode<synchronous>, transform_indices = @transform_1, window_bounds = array<i64: 32, 128>}, {pipeline_mode = #tpu.pipeline_mode<synchronous>, transform_indices = @transform_2, window_bounds = array<i64: 1, 128>}, {transform_indices = @transform_3, window_bounds = array<i64: 8, 128>}]} {
    %c0 = arith.constant 0 : index
    %c0_0 = arith.constant 0 : index
    %0 = vector.load %arg3[%c0, %c0_0] : memref<8x32xf32, #tpu.memory_space<vmem>>, vector<8x32xf32>
    %1 = arith.truncf %0 : vector<8x32xf32> to vector<8x32xbf16>
    %c0_1 = arith.constant 0 : index
    %c0_2 = arith.constant 0 : index
    %2 = vector.load %arg4[%c0_1, %c0_2] : memref<32x128xbf16, #tpu.memory_space<vmem>>, vector<32x128xbf16>
    %cst = arith.constant dense<0.000000e+00> : vector<8x128xf32>
    %3 = tpu.matmul %1, %2, %cst {dimension_numbers = #tpu.dot_dimension_numbers<[1], [0], [0], [1], [0, 0, 1, 1], [], []>} : vector<8x32xbf16>, vector<32x128xbf16>, vector<8x128xf32> -> vector<8x128xf32>
    %c0_3 = arith.constant 0 : index
    %c0_4 = arith.constant 0 : index
    %4 = vector.load %arg5[%c0_3, %c0_4] : memref<1x128xf32, #tpu.memory_space<vmem>>, vector<1x128xf32>
    %5 = vector.broadcast %4 : vector<1x128xf32> to vector<8x128xf32>
    %6 = arith.addf %3, %5 : vector<8x128xf32>
    %cst_5 = arith.constant 0.000000e+00 : f32
    %7 = vector.broadcast %cst_5 : f32 to vector<8x128xf32>
    %8 = arith.cmpf ogt, %6, %7 : vector<8x128xf32>
    %cst_6 = arith.constant 2.000000e-01 : f32
    %9 = vector.broadcast %cst_6 : f32 to vector<8x128xf32>
    %10 = arith.mulf %9, %6 : vector<8x128xf32>
    %11 = arith.select %8, %6, %10 : vector<8x128xi1>, vector<8x128xf32>
    %c0_7 = arith.constant 0 : index
    %c0_8 = arith.constant 0 : index
    %12 = vector.load %arg6[%c0_7, %c0_8] : memref<8x128xf32, #tpu.memory_space<vmem>>, vector<8x128xf32>
    tpu.vector_store %arg6[%c0_7, %c0_8], %11 {strides = array<i32>} : memref<8x128xf32, #tpu.memory_space<vmem>>, vector<8x128xf32>,
    return
  }
  func.func @transform_0(%arg0: i32, %arg1: i32, %arg2: memref<1xi32, #tpu.memory_space<smem>>) -> (i32, i32) {
    %c0_i32 = arith.constant 0 : i32
    %c0_i32_0 = arith.constant 0 : i32
    return %arg0, %c0_i32 : i32, i32
  }
  func.func @transform_1(%arg0: i32, %arg1: i32, %arg2: memref<1xi32, #tpu.memory_space<smem>>) -> (i32, i32) {
    %c0_i32 = arith.constant 0 : i32
    %c0_i32_0 = arith.constant 0 : i32
    return %c0_i32, %arg1 : i32, i32
  }
  func.func @transform_2(%arg0: i32, %arg1: i32, %arg2: memref<1xi32, #tpu.memory_space<smem>>) -> (i32, i32) {
    %c0_i32 = arith.constant 0 : i32
    %c0_i32_0 = arith.constant 0 : i32
    return %c0_i32, %arg1 : i32, i32
  }
  func.func @transform_3(%arg0: i32, %arg1: i32, %arg2: memref<1xi32, #tpu.memory_space<smem>>) -> (i32, i32) {
    %c0_i32 = arith.constant 0 : i32
    return %arg0, %arg1 : i32, i32
  }
}

module attributes {stable_mosaic.version = 11 : i64} {
  func.func @_decoder_block_kernel(%arg0: i32, %arg1: i32, %arg2: memref<1xi32, #tpu.memory_space<smem>>, %arg3: memref<8x32xf32, #tpu.memory_space<vmem>>, %arg4: memref<32x128xbf16, #tpu.memory_space<vmem>>, %arg5: memref<1x128xf32, #tpu.memory_space<vmem>>, %arg6: memref<8x128xf32, #tpu.memory_space<vmem>>) attributes {dimension_semantics = [#tpu.dimension_semantics<parallel>, #tpu.dimension_semantics<parallel>], iteration_bounds = array<i64: 2, 1>, scalar_prefetch = 1 : i64, scratch_operands = 0 : i64, tpu.core_type = #tpu.core_type<tc>, window_params = [{transform_indices = @transform_0, window_bounds = array<i64: 8, 32>}, {transform_indices = @transform_1, window_bounds = array<i64: 32, 128>}, {transform_indices = @transform_2, window_bounds = array<i64: 1, 128>}, {transform_indices = @transform_3, window_bounds = array<i64: 8, 128>}]} {
    %c0 = arith.constant 0 : index
    %c0_0 = arith.constant 0 : index
    %0 = vector.load %arg3[%c0, %c0_0] : memref<8x32xf32, #tpu.memory_space<vmem>>, vector<8x32xf32>
    %1 = arith.truncf %0 : vector<8x32xf32> to vector<8x32xbf16>
    %c0_1 = arith.constant 0 : index
    %c0_2 = arith.constant 0 : index
    %2 = vector.load %arg4[%c0_1, %c0_2] : memref<32x128xbf16, #tpu.memory_space<vmem>>, vector<32x128xbf16>
    %cst = arith.constant dense<0.000000e+00> : vector<8x128xf32>
    %3 = tpu.matmul %1, %2, %cst {dimension_numbers = #tpu.dot_dimension_numbers<[1], [0], [0], [1], [0, 0, 1, 1], [], []>} : vector<8x32xbf16>, vector<32x128xbf16>, vector<8x128xf32> -> vector<8x128xf32>
    %c0_3 = arith.constant 0 : index
    %c0_4 = arith.constant 0 : index
    %4 = vector.load %arg5[%c0_3, %c0_4] : memref<1x128xf32, #tpu.memory_space<vmem>>, vector<1x128xf32>
    %5 = vector.broadcast %4 : vector<1x128xf32> to vector<8x128xf32>
    %6 = arith.addf %3, %5 : vector<8x128xf32>
    %cst_5 = arith.constant 0.000000e+00 : f32
    %7 = vector.broadcast %cst_5 : f32 to vector<8x128xf32>
    %8 = arith.cmpf ogt, %6, %7 : vector<8x128xf32>
    %cst_6 = arith.constant 2.000000e-01 : f32
    %9 = vector.broadcast %cst_6 : f32 to vector<8x128xf32>
    %10 = arith.mulf %9, %6 : vector<8x128xf32>
    %11 = arith.select %8, %6, %10 : vector<8x128xi1>, vector<8x128xf32>
    %c0_7 = arith.constant 0 : index
    %c0_8 = arith.constant 0 : index
    %12 = vector.load %arg6[%c0_7, %c0_8] : memref<8x128xf32, #tpu.memory_space<vmem>>, vector<8x128xf32>
    tpu.vector_store %arg6[%c0_7, %c0_8], %11 {strides = array<i32>} : memref<8x128xf32, #tpu.memory_space<vmem>>, vector<8x128xf32>,
    return
  }
  func.func @transform_0(%arg0: i32, %arg1: i32, %arg2: memref<1xi32, #tpu.memory_space<smem>>) -> (i32, i32) {
    %c0_i32 = arith.constant 0 : i32
    %c0_i32_0 = arith.constant 0 : i32
    return %arg0, %c0_i32 : i32, i32
  }
  func.func @transform_1(%arg0: i32, %arg1: i32, %arg2: memref<1xi32, #tpu.memory_space<smem>>) -> (i32, i32) {
    %c0_i32 = arith.constant 0 : i32
    %c0_i32_0 = arith.constant 0 : i32
    return %c0_i32, %arg1 : i32, i32
  }
  func.func @transform_2(%arg0: i32, %arg1: i32, %arg2: memref<1xi32, #tpu.memory_space<smem>>) -> (i32, i32) {
    %c0_i32 = arith.constant 0 : i32
    %c0_i32_0 = arith.constant 0 : i32
    return %c0_i32, %arg1 : i32, i32
  }
  func.func @transform_3(%arg0: i32, %arg1: i32, %arg2: memref<1xi32, #tpu.memory_space<smem>>) -> (i32, i32) {
    %c0_i32 = arith.constant 0 : i32
    return %arg0, %arg1 : i32, i32
  }
}

</mosaic_0001>

<llo_original>
// kernel: tpu_custom_call.1
$region0: #{tpu_custom_call.1}
  #allocation0 [shape = 'u32[]', space=smem, size = 0x4, offset = 0x4, fixed_abs, tag = 'smem constant byte address 0x4 - core index']
  #allocation1 [shape = 'u32[144,128]{1,0:T(1,128)}', space=vmem, size = 0x12000, scoped, tag = 'internal scratch']
  #allocation2 [shape = 's32[1]{0}', space=sflag, size = 0x4, scoped, tag = 'scoped memory for tpu_custom_call.1']
  #allocation3 [shape = 's32[1]{0:T(128)S(6)}', space=smem, size = 0x200, scoped, tag = 'prefetched SMEM operand 0']
  %s0 = inlined_call_operand.<no memory space> [shape: s32[1], index: 0, kind: input, shape index: {}]
  %s1 = inlined_call_operand.hbm [shape: f32[16,32], index: 1, kind: input, shape index: {}]
  %s2 = inlined_call_operand.hbm [shape: bf16[32,128], index: 2, kind: input, shape index: {}]
  %s3 = inlined_call_operand.vmem [shape: f32[1,128], index: 3, kind: input, shape index: {}]
  %s4 = inlined_call_operand.hbm [shape: f32[16,128], index: 4, kind: output, shape index: {}]
  %s5 = sld [smem:[#allocation0]]
  $region53: #{tpu_custom_call.1} parent=0
    _
  %s7 = ssub.s32 1, %s5
  %s8 = scalar_select 0, %s7, %s5
  %9 = sst [smem:[#allocation3]] %s0
  $region1: #{tpu_custom_call.1} parent=0
    #allocation4 [shape = 'u8[8192]{0}', space=vmem, size = 0x2000, scoped, tag = 'input window, operand 1']
    #allocation5 [shape = 's32[2]{0}', space=sflag, size = 0x8, scoped, tag = 'scoped memory for tpu_custom_call.1']
    #allocation6 [shape = 's32[2]{0}', space=sflag, size = 0x8, scoped, tag = 'scoped memory for tpu_custom_call.1']
    #allocation7 [shape = 'u8[8192]{0}', space=vmem, size = 0x2000, scoped, tag = 'input window, operand 2, single buffered']
    #allocation8 [shape = 's32[1]{0}', space=sflag, size = 0x4, scoped, tag = 'scoped memory for tpu_custom_call.1']
    #allocation9 [shape = 'u8[8192]{0}', space=vmem, size = 0x2000, scoped, tag = 'output window, operand 0']
    %10 = vsyncpa [#allocation5], 0
    %s11 = scalar_lea.sflag [#allocation5], 1
    %12 = vsyncpa %s11, 0
    %13 = vsyncpa [#allocation8], 0
    %14 = vsyncpa [#allocation6], 0
    %s15 = scalar_lea.sflag [#allocation6], 1
    %16 = vsyncpa %s15, 0
    loop: start=0, step=1, limit=4
    $region2: #{tpu_custom_call.1} parent=1 // loop_pre_header
      _
    $region3: #{tpu_custom_call.1} parent=1 // loop_header
      %s18 = sphi 0, %s22
      %p19 = scmp.ge.s32.totalorder %s18, 4
      %s25 = sphi 0, %s37
      %s26 = sphi 0, %s33
      %s27 = sphi 0, %s25
      %s28 = sphi 0, %s26
      %s29 = sphi 0, %s27
      %s30 = sphi 0, %s28
      %s40 = sphi 0, %s42
      %s43 = sphi 0, %s40
      %s44 = sphi 0, %s43
      %s60 = sphi 0, %s44
      %s66 = sphi 0, %s68
      %s69 = sphi 0, %s66
      %s70 = sphi 0, %s69
      %s86 = sphi 0, %s70
      %s92 = sphi 0, %s94
      %s95 = sphi 0, %s92
      %s96 = sphi 0, %s95
      %s112 = sphi 0, %s96
      %s120 = sphi 0, %s122
      %s123 = sphi 0, %s120
      %s124 = sphi 0, %s123
      %s140 = sphi 0, %s124
    $region4: #{tpu_custom_call.1} parent=1 // loop_header_branch
      %21 = sbr.rel (%p19) target = $region8
    $region5: #{tpu_custom_call.1} parent=1 // loop_body
      %s23 = ssub.s32 %s18, 1
      %s24 = ssub.s32 %s18, 2
      %s31 = sadd.s32 1, %s26
      %p32 = scmp.ge.s32.totalorder %s31, 1
      %s33 = scalar_select %p32, 0, %s31
      %s34 = sadd.s32 1, %s25
      %s35 = scalar_select %p32, %s34, %s25
      %p36 = scmp.ge.s32.totalorder %s35, 2
      %s37 = scalar_select %p36, 0, %s35
      %s38 = ssub.s32 %s25, %s37
      %p39 = scmp.eq.s32.totalorder %s38, 0
      %s41 = sadd.s32 %s40, 1
      %s42 = scalar_select %p39, %s40, %s41
      %p45 = pneg %p39
      %p46 = scmp.eq.s32.totalorder %s18, 1
      %p47 = por %p45, %p46
      %p48 = scmp.ne.s32.totalorder %s40, %s43
      %p49 = scmp.eq.s32.totalorder %s18, 0
      %p50 = por %p48, %p49
      %p51 = scmp.ne.s32.totalorder %s40, %s43
      %p52 = scmp.eq.s32.totalorder %s23, 1
      %p53 = por %p51, %p52
      %p54 = scmp.ne.s32.totalorder %s43, %s44
      %p55 = scmp.eq.s32.totalorder %s23, 0
      %p56 = por %p54, %p55
      %p57 = scmp.ne.s32.totalorder %s43, %s44
      %p58 = scmp.eq.s32.totalorder %s24, 1
      %p59 = por %p57, %p58
      %p61 = scmp.ne.s32.totalorder %s44, %s60
      %p62 = scmp.eq.s32.totalorder %s24, 0
      %p63 = por %p61, %p62
      %s64 = ssub.s32 %s26, %s33
      %p65 = scmp.eq.s32.totalorder %s64, 0
      %s67 = sadd.s32 %s66, 1
      %s68 = scalar_select %p65, %s66, %s67
      %p71 = pneg %p65
      %p72 = scmp.eq.s32.totalorder %s18, 1
      %p73 = por %p71, %p72
      %p74 = scmp.ne.s32.totalorder %s66, %s69
      %p75 = scmp.eq.s32.totalorder %s18, 0
      %p76 = por %p74, %p75
      %p77 = scmp.ne.s32.totalorder %s66, %s69
      %p78 = scmp.eq.s32.totalorder %s23, 1
      %p79 = por %p77, %p78
      %p80 = scmp.ne.s32.totalorder %s69, %s70
      %p81 = scmp.eq.s32.totalorder %s23, 0
      %p82 = por %p80, %p81
      %p83 = scmp.ne.s32.totalorder %s69, %s70
      %p84 = scmp.eq.s32.totalorder %s24, 1
      %p85 = por %p83, %p84
      %p87 = scmp.ne.s32.totalorder %s70, %s86
      %p88 = scmp.eq.s32.totalorder %s24, 0
      %p89 = por %p87, %p88
      %s90 = ssub.s32 %s26, %s33
      %p91 = scmp.eq.s32.totalorder %s90, 0
      %s93 = sadd.s32 %s92, 1
      %s94 = scalar_select %p91, %s92, %s93
      %p97 = pneg %p91
      %p98 = scmp.eq.s32.totalorder %s18, 1
      %p99 = por %p97, %p98
      %p100 = scmp.ne.s32.totalorder %s92, %s95
      %p101 = scmp.eq.s32.totalorder %s18, 0
      %p102 = por %p100, %p101
      %p103 = scmp.ne.s32.totalorder %s92, %s95
      %p104 = scmp.eq.s32.totalorder %s23, 1
      %p105 = por %p103, %p104
      %p106 = scmp.ne.s32.totalorder %s95, %s96
      %p107 = scmp.eq.s32.totalorder %s23, 0
      %p108 = por %p106, %p107
      %p109 = scmp.ne.s32.totalorder %s95, %s96
      %p110 = scmp.eq.s32.totalorder %s24, 1
      %p111 = por %p109, %p110
      %p113 = scmp.ne.s32.totalorder %s96, %s112
      %p114 = scmp.eq.s32.totalorder %s24, 0
      %p115 = por %p113, %p114
      %s116 = ssub.s32 %s25, %s37
      %s117 = ssub.s32 %s26, %s33
      %s118 = sor.u32 %s116, %s117
      %p119 = scmp.eq.s32.totalorder %s118, 0
      %s121 = sadd.s32 %s120, 1
      %s122 = scalar_select %p119, %s120, %s121
      %p125 = pneg %p119
      %p126 = scmp.eq.s32.totalorder %s18, 1
      %p127 = por %p125, %p126
      %p128 = scmp.ne.s32.totalorder %s120, %s123
      %p129 = scmp.eq.s32.totalorder %s18, 0
      %p130 = por %p128, %p129
      %p131 = scmp.ne.s32.totalorder %s120, %s123
      %p132 = scmp.eq.s32.totalorder %s23, 1
      %p133 = por %p131, %p132
      %p134 = scmp.ne.s32.totalorder %s123, %s124
      %p135 = scmp.eq.s32.totalorder %s23, 0
      %p136 = por %p134, %p135
      %p137 = scmp.ne.s32.totalorder %s123, %s124
      %p138 = scmp.eq.s32.totalorder %s24, 1
      %p139 = por %p137, %p138
      %p141 = scmp.ne.s32.totalorder %s124, %s140
      %p142 = scmp.eq.s32.totalorder %s24, 0
      %p143 = por %p141, %p142
      %p144 = scmp.le.s32.totalorder 1, %s18
      %p145 = scmp.lt.s32.totalorder %s18, 3
      %p146 = pnand %p144, %p145
      %p147 = pneg %p146
      // Predicated region
      $region9: #{tpu_custom_call.1} parent=5 // pred_check
        _
      $region10: #{tpu_custom_call.1} parent=5 // pred_check_branch
        %149 = sbr.rel (%p146) target = $region12
      $region11: #{tpu_custom_call.1} parent=5 // pred_region
        %s150 = ssub.s32 %s18, 1
        // Predicated region
        $region13: #{tpu_custom_call.1} parent=11 // pred_check
          %p151 = pneg %p82
        $region14: #{tpu_custom_call.1} parent=11 // pred_check_branch
          %153 = sbr.rel (%p151) target = $region16
        $region15: #{tpu_custom_call.1} parent=11 // pred_region
          %s155 = ssub.s32 256, 256
          %156 = vsyncadd [#allocation8], %s155
          %s157 = smul.addr %s28, 64
          %s158 = scalar_lea.hbm %s2, %s157
          %s159 = sshll.u32 [#allocation7], 4
          %s160 = int_to_ptr.vmem [resolvable:$true] %s159
          %165 = dma.hbm_to_vmem [thread:$0]  %s158, 256, %s160, [#allocation8], 64, 64, 4
        $region16: #{tpu_custom_call.1} parent=11 // pred_fallthru
          _
        // Predicated region
        $region17: #{tpu_custom_call.1} parent=11 // pred_check
          %p166 = pneg %p108
        $region18: #{tpu_custom_call.1} parent=11 // pred_check_branch
          %168 = sbr.rel (%p166) target = $region20
        $region19: #{tpu_custom_call.1} parent=11 // pred_region
          %p169 = scmp.lt.s32.totalorder %s28, 0
          %s170 = scalar_select %p169, %s28, 0
          %s171 = scalar_lea.vmem %s3, %s170
        $region20: #{tpu_custom_call.1} parent=11 // pred_fallthru
          _
      $region12: #{tpu_custom_call.1} parent=5 // pred_fallthru
        _
      %p172 = scmp.lt.s32.totalorder %s18, 2
      // Predicated region
      $region21: #{tpu_custom_call.1} parent=5 // pred_check
        %p173 = pneg %p172
      $region22: #{tpu_custom_call.1} parent=5 // pred_check_branch
        %175 = sbr.rel (%p173) target = $region24
      $region23: #{tpu_custom_call.1} parent=5 // pred_region
        // Predicated region
        $region25: #{tpu_custom_call.1} parent=23 // pred_check
          %p176 = pneg %p50
        $region26: #{tpu_custom_call.1} parent=23 // pred_check_branch
          %178 = sbr.rel (%p176) target = $region28
        $region27: #{tpu_custom_call.1} parent=23 // pred_region
          %s179 = sand.u32 %s40, 1
          %s180 = scalar_lea.sflag [#allocation5], %s179
          %s181 = sand.u32 %s40, 1
          %s182 = smul.addr %s181, 8
          %s183 = scalar_lea.vmem [#allocation4], %s182
          %s185 = ssub.s32 128, 128
          %186 = vsyncadd %s180, %s185
          %s187 = smul.addr %s25, 128
          %s188 = scalar_lea.hbm %s1, %s187
          %s190 = sshll.u32 %s183, 4
          %s191 = int_to_ptr.vmem [resolvable:$true] %s190
          %193 = dma.hbm_to_vmem [thread:$0]  %s188, 128, %s191, %s180
        $region28: #{tpu_custom_call.1} parent=23 // pred_fallthru
          _
      $region24: #{tpu_custom_call.1} parent=5 // pred_fallthru
        _
      %p194 = scmp.le.s32.totalorder 1, %s18
      %p195 = scmp.lt.s32.totalorder %s18, 3
      %p196 = pnand %p194, %p195
      %p197 = pneg %p196
      // Predicated region
      $region29: #{tpu_custom_call.1} parent=5 // pred_check
        _
      $region30: #{tpu_custom_call.1} parent=5 // pred_check_branch
        %199 = sbr.rel (%p196) target = $region32
      $region31: #{tpu_custom_call.1} parent=5 // pred_region
        %s200 = ssub.s32 %s18, 1
        %s201 = sand.u32 %s43, 1
        %s202 = scalar_lea.sflag [#allocation5], %s201
        %s203 = sand.u32 %s43, 1
        %s204 = smul.addr %s203, 8
        %s205 = scalar_lea.vmem [#allocation4], %s204
        // Predicated region
        $region33: #{tpu_custom_call.1} parent=31 // pred_check
          %p206 = pneg %p56
        $region34: #{tpu_custom_call.1} parent=31 // pred_check_branch
          %208 = sbr.rel (%p206) target = $region36
        $region35: #{tpu_custom_call.1} parent=31 // pred_region
          %209 = dma.done %s202, 128
        $region36: #{tpu_custom_call.1} parent=31 // pred_fallthru
          _
        // Predicated region
        $region37: #{tpu_custom_call.1} parent=31 // pred_check
          %p210 = pneg %p82
        $region38: #{tpu_custom_call.1} parent=31 // pred_check_branch
          %212 = sbr.rel (%p210) target = $region40
        $region39: #{tpu_custom_call.1} parent=31 // pred_region
          %213 = dma.done [#allocation8], 256
        $region40: #{tpu_custom_call.1} parent=31 // pred_fallthru
          _
        %s214 = sand.u32 %s43, 1
        %s215 = scalar_lea.sflag [#allocation5], %s214
        %s216 = sand.u32 %s43, 1
        %s217 = smul.addr %s216, 8
        %s218 = scalar_lea.vmem [#allocation4], %s217
        %p219 = pneg %p56
        %p220 = pneg %p53
        %p221 = pneg %p82
        %p222 = pneg %p79
        %p223 = scmp.lt.s32.totalorder %s28, 0
        %s224 = scalar_select %p223, %s28, 0
        %s225 = scalar_lea.vmem %s3, %s224
        %p226 = pneg %p108
        %p227 = pneg %p105
        %p228 = pneg %p136
        %p229 = pneg %p133
        %s230 = sand.u32 %s123, 1
        %s231 = scalar_lea.sflag [#allocation6], %s230
        %s232 = sand.u32 %s123, 1
        %s233 = smul.addr %s232, 8
        %s234 = scalar_lea.vmem [#allocation9], %s233
        %p235 = scmp.lt.s32.totalorder %s28, 0
        %s236 = scalar_select %p235, %s28, 0
        %s237 = scalar_lea.vmem %s3, %s236
        %v239 = vld [vmem:[%s205] sm:$0xff]
        %v240 = vpack.c.bf16 %v239, %v239
        %v241 = vld [vmem:[#allocation7] sm:$0xf]
        %v242 = vld [vmem:[#allocation7 + $0x4] sm:$0xf]
        %v243 = vld [vmem:[#allocation7 + $0x8] sm:$0xf]
        %v244 = vld [vmem:[#allocation7 + $0xc] sm:$0xf]
        %v245 = vld [vmem:[%s237] sm:$0x1]
        %v247 = vlaneseq
        %v248 = vshrl.u32 %v247, 7
        %v249 = vsub.s32 0, %v248
        %v250 = vrot.slane %v245, %v249
        %v256 = vunpack.c.l.b16 %v241
        %v257 = vunpack.c.l.b16 %v242
        %v258 = vunpack.c.l.b16 %v243
        %v259 = vunpack.c.l.b16 %v244
        %v260 = vpack.c.b16 %v257, %v256
        %v261 = vpack.c.b16 %v259, %v258
        %vm264 = vcmask 261120
        %v266 = vsel %vm264, %v240, 0
        %268 = vmatprep.subr.bf16.mxu0 0
        %269 = vmatpush1.bf16.msra.mxu0 %v260
        %270 = vmatprep.subr.bf16.mxu0 0
        %271 = vmatpush1.bf16.msra.mxu0 %v261
        %272 = vmatprep.subr.bf16.mxu0 0
        %273 = vmatpush1.bf16.msra.mxu0 0
        %274 = vmatprep.subr.bf16.mxu0 0
        %275 = vmatpush1.bf16.msra.mxu0 0
        %276 = vmatprep.subr.bf16.mxu0 0
        %277 = vmatpush1.bf16.msra.mxu0 0
        %278 = vmatprep.subr.bf16.mxu0 0
        %279 = vmatpush1.bf16.msra.mxu0 0
        %280 = vmatprep.subr.bf16.mxu0 0
        %281 = vmatpush1.bf16.msra.mxu0 0
        %282 = vmatprep.subr.bf16.mxu0 0
        %283 = vmatpush1.bf16.msra.mxu0 0
        %284 = vmatprep.subr.bf16.mxu0 0
        %285 = vmatpush1.bf16.msra.mxu0 0
        %286 = vmatprep.subr.bf16.mxu0 0
        %287 = vmatpush1.bf16.msra.mxu0 0
        %288 = vmatprep.subr.bf16.mxu0 0
        %289 = vmatpush1.bf16.msra.mxu0 0
        %290 = vmatprep.subr.bf16.mxu0 0
        %291 = vmatpush1.bf16.msra.mxu0 0
        %292 = vmatprep.subr.bf16.mxu0 0
        %293 = vmatpush1.bf16.msra.mxu0 0
        %294 = vmatprep.subr.bf16.mxu0 0
        %295 = vmatpush1.bf16.msra.mxu0 0
        %296 = vmatprep.subr.bf16.mxu0 0
        %297 = vmatpush1.bf16.msra.mxu0 0
        %298 = vmatprep.subr.bf16.mxu0 0
        %299 = vmatpush1.bf16.msra.mxu0 0
        %300 = vmatprep.mubr.bf16.mxu0 0
        %301 = vmatmul.mubr.bf16.gmra.mrb[0].mxu0 %v266
        %v302 = vpop.f32.mrb[0].mxu0
        %v303 = vadd.f32 %v250, %v302
        %v304 = vpop.f32.mrb[0].mxu0
        %v305 = vpop.f32.mrb[0].mxu0
        %v306 = vpop.f32.mrb[0].mxu0
        %307 = vdwg.mxu0
        %vm308 = vcmp.gt.f32.partialorder %v303, 0.0
        %v309 = vmul.f32 %v303, 0.2
        %v310 = vsel %vm308, %v303, %v309
        %311 = vst [vmem:[%s234] sm:$0xff] %v310
        %s312 = sand.u32 %s123, 1
        %s313 = scalar_lea.sflag [#allocation6], %s312
        %s314 = sand.u32 %s123, 1
        %s315 = smul.addr %s314, 8
        %s316 = scalar_lea.vmem [#allocation9], %s315
        // Predicated region
        $region41: #{tpu_custom_call.1} parent=31 // pred_check
          %p317 = pneg %p133
        $region42: #{tpu_custom_call.1} parent=31 // pred_check_branch
          %319 = sbr.rel (%p317) target = $region44
        $region43: #{tpu_custom_call.1} parent=31 // pred_region
          %s321 = ssub.s32 128, 128
          %322 = vsyncadd %s313, %s321
          %s323 = sadd.s32 %s28, %s27
          %s324 = smul.addr %s323, 128
          %s325 = scalar_lea.hbm %s4, %s324
          %s327 = sshll.u32 %s316, 4
          %s328 = int_to_ptr.vmem [resolvable:$true] %s327
          %330 = dma.vmem_to_hbm [thread:$0]  %s328, 128, %s325, %s313
        $region44: #{tpu_custom_call.1} parent=31 // pred_fallthru
          _
      $region32: #{tpu_custom_call.1} parent=5 // pred_fallthru
        _
      %p331 = scmp.le.s32.totalorder 2, %s18
      // Predicated region
      $region45: #{tpu_custom_call.1} parent=5 // pred_check
        %p332 = pneg %p331
      $region46: #{tpu_custom_call.1} parent=5 // pred_check_branch
        %334 = sbr.rel (%p332) target = $region48
      $region47: #{tpu_custom_call.1} parent=5 // pred_region
        %s335 = ssub.s32 %s18, 2
        // Predicated region
        $region49: #{tpu_custom_call.1} parent=47 // pred_check
          %p336 = pneg %p139
        $region50: #{tpu_custom_call.1} parent=47 // pred_check_branch
          %338 = sbr.rel (%p336) target = $region52
        $region51: #{tpu_custom_call.1} parent=47 // pred_region
          %s339 = sand.u32 %s124, 1
          %s340 = scalar_lea.sflag [#allocation6], %s339
          %s341 = sand.u32 %s124, 1
          %s342 = smul.addr %s341, 8
          %s343 = scalar_lea.vmem [#allocation9], %s342
          %344 = dma.done %s340, 128
        $region52: #{tpu_custom_call.1} parent=47 // pred_fallthru
          _
      $region48: #{tpu_custom_call.1} parent=5 // pred_fallthru
        _
    $region6: #{tpu_custom_call.1} parent=1 // loop_footer
      %s22 = sadd.s32 1, %s18
    $region7: #{tpu_custom_call.1} parent=1 // loop_footer_branch
      %17 = sbr.rel target = $region3
    $region8: #{tpu_custom_call.1} parent=1 // loop_exit
      _
    %345 = vsyncpa [#allocation5], 1
    %s346 = scalar_lea.sflag [#allocation5], 1
    %347 = vsyncpa %s346, 1
    %348 = vsyncpa [#allocation8], 1
    %349 = vsyncpa [#allocation6], 1
    %s350 = scalar_lea.sflag [#allocation6], 1
    %351 = vsyncpa %s350, 1

// kernel: tpu_custom_call.1
$region0: #{tpu_custom_call.1}
  #allocation0 [shape = 'u32[]', space=smem, size = 0x4, offset = 0x4, fixed_abs, tag = 'smem constant byte address 0x4 - core index']
  #allocation1 [shape = 'u32[144,128]{1,0:T(1,128)}', space=vmem, size = 0x12000, scoped, tag = 'internal scratch']
  #allocation2 [shape = 's32[1]{0}', space=sflag, size = 0x4, scoped, tag = 'scoped memory for tpu_custom_call.1']
  #allocation3 [shape = 's32[1]{0:T(128)S(6)}', space=smem, size = 0x200, scoped, tag = 'prefetched SMEM operand 0']
  %s0 = inlined_call_operand.<no memory space> [shape: s32[1], index: 0, kind: input, shape index: {}]
  %s1 = inlined_call_operand.hbm [shape: f32[16,32], index: 1, kind: input, shape index: {}]
  %s2 = inlined_call_operand.hbm [shape: bf16[32,128], index: 2, kind: input, shape index: {}]
  %s3 = inlined_call_operand.vmem [shape: f32[1,128], index: 3, kind: input, shape index: {}]
  %s4 = inlined_call_operand.hbm [shape: f32[16,128], index: 4, kind: output, shape index: {}]
  %s5 = sld [smem:[#allocation0]]
  $region53: #{tpu_custom_call.1} parent=0
    _
  %s7 = ssub.s32 1, %s5
  %s8 = scalar_select 0, %s7, %s5
  %9 = sst [smem:[#allocation3]] %s0
  $region1: #{tpu_custom_call.1} parent=0
    #allocation4 [shape = 'u8[8192]{0}', space=vmem, size = 0x2000, scoped, tag = 'input window, operand 1']
    #allocation5 [shape = 's32[2]{0}', space=sflag, size = 0x8, scoped, tag = 'scoped memory for tpu_custom_call.1']
    #allocation6 [shape = 's32[2]{0}', space=sflag, size = 0x8, scoped, tag = 'scoped memory for tpu_custom_call.1']
    #allocation7 [shape = 'u8[8192]{0}', space=vmem, size = 0x2000, scoped, tag = 'input window, operand 2, single buffered']
    #allocation8 [shape = 's32[1]{0}', space=sflag, size = 0x4, scoped, tag = 'scoped memory for tpu_custom_call.1']
    #allocation9 [shape = 'u8[8192]{0}', space=vmem, size = 0x2000, scoped, tag = 'output window, operand 0']
    %10 = vsyncpa [#allocation5], 0
    %s11 = scalar_lea.sflag [#allocation5], 1
    %12 = vsyncpa %s11, 0
    %13 = vsyncpa [#allocation8], 0
    %14 = vsyncpa [#allocation6], 0
    %s15 = scalar_lea.sflag [#allocation6], 1
    %16 = vsyncpa %s15, 0
    loop: start=0, step=1, limit=4
    $region2: #{tpu_custom_call.1} parent=1 // loop_pre_header
      _
    $region3: #{tpu_custom_call.1} parent=1 // loop_header
      %s18 = sphi 0, %s22
      %p19 = scmp.ge.s32.totalorder %s18, 4
      %s25 = sphi 0, %s37
      %s26 = sphi 0, %s33
      %s27 = sphi 0, %s25
      %s28 = sphi 0, %s26
      %s29 = sphi 0, %s27
      %s30 = sphi 0, %s28
      %s40 = sphi 0, %s42
      %s43 = sphi 0, %s40
      %s44 = sphi 0, %s43
      %s60 = sphi 0, %s44
      %s66 = sphi 0, %s68
      %s69 = sphi 0, %s66
      %s70 = sphi 0, %s69
      %s86 = sphi 0, %s70
      %s92 = sphi 0, %s94
      %s95 = sphi 0, %s92
      %s96 = sphi 0, %s95
      %s112 = sphi 0, %s96
      %s120 = sphi 0, %s122
      %s123 = sphi 0, %s120
      %s124 = sphi 0, %s123
      %s140 = sphi 0, %s124
    $region4: #{tpu_custom_call.1} parent=1 // loop_header_branch
      %21 = sbr.rel (%p19) target = $region8
    $region5: #{tpu_custom_call.1} parent=1 // loop_body
      %s23 = ssub.s32 %s18, 1
      %s24 = ssub.s32 %s18, 2
      %s31 = sadd.s32 1, %s26
      %p32 = scmp.ge.s32.totalorder %s31, 1
      %s33 = scalar_select %p32, 0, %s31
      %s34 = sadd.s32 1, %s25
      %s35 = scalar_select %p32, %s34, %s25
      %p36 = scmp.ge.s32.totalorder %s35, 2
      %s37 = scalar_select %p36, 0, %s35
      %s38 = ssub.s32 %s25, %s37
      %p39 = scmp.eq.s32.totalorder %s38, 0
      %s41 = sadd.s32 %s40, 1
      %s42 = scalar_select %p39, %s40, %s41
      %p45 = pneg %p39
      %p46 = scmp.eq.s32.totalorder %s18, 1
      %p47 = por %p45, %p46
      %p48 = scmp.ne.s32.totalorder %s40, %s43
      %p49 = scmp.eq.s32.totalorder %s18, 0
      %p50 = por %p48, %p49
      %p51 = scmp.ne.s32.totalorder %s40, %s43
      %p52 = scmp.eq.s32.totalorder %s23, 1
      %p53 = por %p51, %p52
      %p54 = scmp.ne.s32.totalorder %s43, %s44
      %p55 = scmp.eq.s32.totalorder %s23, 0
      %p56 = por %p54, %p55
      %p57 = scmp.ne.s32.totalorder %s43, %s44
      %p58 = scmp.eq.s32.totalorder %s24, 1
      %p59 = por %p57, %p58
      %p61 = scmp.ne.s32.totalorder %s44, %s60
      %p62 = scmp.eq.s32.totalorder %s24, 0
      %p63 = por %p61, %p62
      %s64 = ssub.s32 %s26, %s33
      %p65 = scmp.eq.s32.totalorder %s64, 0
      %s67 = sadd.s32 %s66, 1
      %s68 = scalar_select %p65, %s66, %s67
      %p71 = pneg %p65
      %p72 = scmp.eq.s32.totalorder %s18, 1
      %p73 = por %p71, %p72
      %p74 = scmp.ne.s32.totalorder %s66, %s69
      %p75 = scmp.eq.s32.totalorder %s18, 0
      %p76 = por %p74, %p75
      %p77 = scmp.ne.s32.totalorder %s66, %s69
      %p78 = scmp.eq.s32.totalorder %s23, 1
      %p79 = por %p77, %p78
      %p80 = scmp.ne.s32.totalorder %s69, %s70
      %p81 = scmp.eq.s32.totalorder %s23, 0
      %p82 = por %p80, %p81
      %p83 = scmp.ne.s32.totalorder %s69, %s70
      %p84 = scmp.eq.s32.totalorder %s24, 1
      %p85 = por %p83, %p84
      %p87 = scmp.ne.s32.totalorder %s70, %s86
      %p88 = scmp.eq.s32.totalorder %s24, 0
      %p89 = por %p87, %p88
      %s90 = ssub.s32 %s26, %s33
      %p91 = scmp.eq.s32.totalorder %s90, 0
      %s93 = sadd.s32 %s92, 1
      %s94 = scalar_select %p91, %s92, %s93
      %p97 = pneg %p91
      %p98 = scmp.eq.s32.totalorder %s18, 1
      %p99 = por %p97, %p98
      %p100 = scmp.ne.s32.totalorder %s92, %s95
      %p101 = scmp.eq.s32.totalorder %s18, 0
      %p102 = por %p100, %p101
      %p103 = scmp.ne.s32.totalorder %s92, %s95
      %p104 = scmp.eq.s32.totalorder %s23, 1
      %p105 = por %p103, %p104
      %p106 = scmp.ne.s32.totalorder %s95, %s96
      %p107 = scmp.eq.s32.totalorder %s23, 0
      %p108 = por %p106, %p107
      %p109 = scmp.ne.s32.totalorder %s95, %s96
      %p110 = scmp.eq.s32.totalorder %s24, 1
      %p111 = por %p109, %p110
      %p113 = scmp.ne.s32.totalorder %s96, %s112
      %p114 = scmp.eq.s32.totalorder %s24, 0
      %p115 = por %p113, %p114
      %s116 = ssub.s32 %s25, %s37
      %s117 = ssub.s32 %s26, %s33
      %s118 = sor.u32 %s116, %s117
      %p119 = scmp.eq.s32.totalorder %s118, 0
      %s121 = sadd.s32 %s120, 1
      %s122 = scalar_select %p119, %s120, %s121
      %p125 = pneg %p119
      %p126 = scmp.eq.s32.totalorder %s18, 1
      %p127 = por %p125, %p126
      %p128 = scmp.ne.s32.totalorder %s120, %s123
      %p129 = scmp.eq.s32.totalorder %s18, 0
      %p130 = por %p128, %p129
      %p131 = scmp.ne.s32.totalorder %s120, %s123
      %p132 = scmp.eq.s32.totalorder %s23, 1
      %p133 = por %p131, %p132
      %p134 = scmp.ne.s32.totalorder %s123, %s124
      %p135 = scmp.eq.s32.totalorder %s23, 0
      %p136 = por %p134, %p135
      %p137 = scmp.ne.s32.totalorder %s123, %s124
      %p138 = scmp.eq.s32.totalorder %s24, 1
      %p139 = por %p137, %p138
      %p141 = scmp.ne.s32.totalorder %s124, %s140
      %p142 = scmp.eq.s32.totalorder %s24, 0
      %p143 = por %p141, %p142
      %p144 = scmp.le.s32.totalorder 1, %s18
      %p145 = scmp.lt.s32.totalorder %s18, 3
      %p146 = pnand %p144, %p145
      %p147 = pneg %p146
      // Predicated region
      $region9: #{tpu_custom_call.1} parent=5 // pred_check
        _
      $region10: #{tpu_custom_call.1} parent=5 // pred_check_branch
        %149 = sbr.rel (%p146) target = $region12
      $region11: #{tpu_custom_call.1} parent=5 // pred_region
        %s150 = ssub.s32 %s18, 1
        // Predicated region
        $region13: #{tpu_custom_call.1} parent=11 // pred_check
          %p151 = pneg %p82
        $region14: #{tpu_custom_call.1} parent=11 // pred_check_branch
          %153 = sbr.rel (%p151) target = $region16
        $region15: #{tpu_custom_call.1} parent=11 // pred_region
          %s155 = ssub.s32 256, 256
          %156 = vsyncadd [#allocation8], %s155
          %s157 = smul.addr %s28, 64
          %s158 = scalar_lea.hbm %s2, %s157
          %s159 = sshll.u32 [#allocation7], 4
          %s160 = int_to_ptr.vmem [resolvable:$true] %s159
          %165 = dma.hbm_to_vmem [thread:$0]  %s158, 256, %s160, [#allocation8], 64, 64, 4
        $region16: #{tpu_custom_call.1} parent=11 // pred_fallthru
          _
        // Predicated region
        $region17: #{tpu_custom_call.1} parent=11 // pred_check
          %p166 = pneg %p108
        $region18: #{tpu_custom_call.1} parent=11 // pred_check_branch
          %168 = sbr.rel (%p166) target = $region20
        $region19: #{tpu_custom_call.1} parent=11 // pred_region
          %p169 = scmp.lt.s32.totalorder %s28, 0
          %s170 = scalar_select %p169, %s28, 0
          %s171 = scalar_lea.vmem %s3, %s170
        $region20: #{tpu_custom_call.1} parent=11 // pred_fallthru
          _
      $region12: #{tpu_custom_call.1} parent=5 // pred_fallthru
        _
      %p172 = scmp.lt.s32.totalorder %s18, 2
      // Predicated region
      $region21: #{tpu_custom_call.1} parent=5 // pred_check
        %p173 = pneg %p172
      $region22: #{tpu_custom_call.1} parent=5 // pred_check_branch
        %175 = sbr.rel (%p173) target = $region24
      $region23: #{tpu_custom_call.1} parent=5 // pred_region
        // Predicated region
        $region25: #{tpu_custom_call.1} parent=23 // pred_check
          %p176 = pneg %p50
        $region26: #{tpu_custom_call.1} parent=23 // pred_check_branch
          %178 = sbr.rel (%p176) target = $region28
        $region27: #{tpu_custom_call.1} parent=23 // pred_region
          %s179 = sand.u32 %s40, 1
          %s180 = scalar_lea.sflag [#allocation5], %s179
          %s181 = sand.u32 %s40, 1
          %s182 = smul.addr %s181, 8
          %s183 = scalar_lea.vmem [#allocation4], %s182
          %s185 = ssub.s32 128, 128
          %186 = vsyncadd %s180, %s185
          %s187 = smul.addr %s25, 128
          %s188 = scalar_lea.hbm %s1, %s187
          %s190 = sshll.u32 %s183, 4
          %s191 = int_to_ptr.vmem [resolvable:$true] %s190
          %193 = dma.hbm_to_vmem [thread:$0]  %s188, 128, %s191, %s180
        $region28: #{tpu_custom_call.1} parent=23 // pred_fallthru
          _
      $region24: #{tpu_custom_call.1} parent=5 // pred_fallthru
        _
      %p194 = scmp.le.s32.totalorder 1, %s18
      %p195 = scmp.lt.s32.totalorder %s18, 3
      %p196 = pnand %p194, %p195
      %p197 = pneg %p196
      // Predicated region
      $region29: #{tpu_custom_call.1} parent=5 // pred_check
        _
      $region30: #{tpu_custom_call.1} parent=5 // pred_check_branch
        %199 = sbr.rel (%p196) target = $region32
      $region31: #{tpu_custom_call.1} parent=5 // pred_region
        %s200 = ssub.s32 %s18, 1
        %s201 = sand.u32 %s43, 1
        %s202 = scalar_lea.sflag [#allocation5], %s201
        %s203 = sand.u32 %s43, 1
        %s204 = smul.addr %s203, 8
        %s205 = scalar_lea.vmem [#allocation4], %s204
        // Predicated region
        $region33: #{tpu_custom_call.1} parent=31 // pred_check
          %p206 = pneg %p56
        $region34: #{tpu_custom_call.1} parent=31 // pred_check_branch
          %208 = sbr.rel (%p206) target = $region36
        $region35: #{tpu_custom_call.1} parent=31 // pred_region
          %209 = dma.done %s202, 128
        $region36: #{tpu_custom_call.1} parent=31 // pred_fallthru
          _
        // Predicated region
        $region37: #{tpu_custom_call.1} parent=31 // pred_check
          %p210 = pneg %p82
        $region38: #{tpu_custom_call.1} parent=31 // pred_check_branch
          %212 = sbr.rel (%p210) target = $region40
        $region39: #{tpu_custom_call.1} parent=31 // pred_region
          %213 = dma.done [#allocation8], 256
        $region40: #{tpu_custom_call.1} parent=31 // pred_fallthru
          _
        %s214 = sand.u32 %s43, 1
        %s215 = scalar_lea.sflag [#allocation5], %s214
        %s216 = sand.u32 %s43, 1
        %s217 = smul.addr %s216, 8
        %s218 = scalar_lea.vmem [#allocation4], %s217
        %p219 = pneg %p56
        %p220 = pneg %p53
        %p221 = pneg %p82
        %p222 = pneg %p79
        %p223 = scmp.lt.s32.totalorder %s28, 0
        %s224 = scalar_select %p223, %s28, 0
        %s225 = scalar_lea.vmem %s3, %s224
        %p226 = pneg %p108
        %p227 = pneg %p105
        %p228 = pneg %p136
        %p229 = pneg %p133
        %s230 = sand.u32 %s123, 1
        %s231 = scalar_lea.sflag [#allocation6], %s230
        %s232 = sand.u32 %s123, 1
        %s233 = smul.addr %s232, 8
        %s234 = scalar_lea.vmem [#allocation9], %s233
        %p235 = scmp.lt.s32.totalorder %s28, 0
        %s236 = scalar_select %p235, %s28, 0
        %s237 = scalar_lea.vmem %s3, %s236
        %v239 = vld [vmem:[%s205] sm:$0xff]
        %v240 = vpack.c.bf16 %v239, %v239
        %v241 = vld [vmem:[#allocation7] sm:$0xf]
        %v242 = vld [vmem:[#allocation7 + $0x4] sm:$0xf]
        %v243 = vld [vmem:[#allocation7 + $0x8] sm:$0xf]
        %v244 = vld [vmem:[#allocation7 + $0xc] sm:$0xf]
        %v245 = vld [vmem:[%s237] sm:$0x1]
        %v247 = vlaneseq
        %v248 = vshrl.u32 %v247, 7
        %v249 = vsub.s32 0, %v248
        %v250 = vrot.slane %v245, %v249
        %v256 = vunpack.c.l.b16 %v241
        %v257 = vunpack.c.l.b16 %v242
        %v258 = vunpack.c.l.b16 %v243
        %v259 = vunpack.c.l.b16 %v244
        %v260 = vpack.c.b16 %v257, %v256
        %v261 = vpack.c.b16 %v259, %v258
        %vm264 = vcmask 261120
        %v266 = vsel %vm264, %v240, 0
        %268 = vmatprep.subr.bf16.mxu0 0
        %269 = vmatpush1.bf16.msra.mxu0 %v260
        %270 = vmatprep.subr.bf16.mxu0 0
        %271 = vmatpush1.bf16.msra.mxu0 %v261
        %272 = vmatprep.subr.bf16.mxu0 0
        %273 = vmatpush1.bf16.msra.mxu0 0
        %274 = vmatprep.subr.bf16.mxu0 0
        %275 = vmatpush1.bf16.msra.mxu0 0
        %276 = vmatprep.subr.bf16.mxu0 0
        %277 = vmatpush1.bf16.msra.mxu0 0
        %278 = vmatprep.subr.bf16.mxu0 0
        %279 = vmatpush1.bf16.msra.mxu0 0
        %280 = vmatprep.subr.bf16.mxu0 0
        %281 = vmatpush1.bf16.msra.mxu0 0
        %282 = vmatprep.subr.bf16.mxu0 0
        %283 = vmatpush1.bf16.msra.mxu0 0
        %284 = vmatprep.subr.bf16.mxu0 0
        %285 = vmatpush1.bf16.msra.mxu0 0
        %286 = vmatprep.subr.bf16.mxu0 0
        %287 = vmatpush1.bf16.msra.mxu0 0
        %288 = vmatprep.subr.bf16.mxu0 0
        %289 = vmatpush1.bf16.msra.mxu0 0
        %290 = vmatprep.subr.bf16.mxu0 0
        %291 = vmatpush1.bf16.msra.mxu0 0
        %292 = vmatprep.subr.bf16.mxu0 0
        %293 = vmatpush1.bf16.msra.mxu0 0
        %294 = vmatprep.subr.bf16.mxu0 0
        %295 = vmatpush1.bf16.msra.mxu0 0
        %296 = vmatprep.subr.bf16.mxu0 0
        %297 = vmatpush1.bf16.msra.mxu0 0
        %298 = vmatprep.subr.bf16.mxu0 0
        %299 = vmatpush1.bf16.msra.mxu0 0
        %300 = vmatprep.mubr.bf16.mxu0 0
        %301 = vmatmul.mubr.bf16.gmra.mrb[0].mxu0 %v266
        %v302 = vpop.f32.mrb[0].mxu0
        %v303 = vadd.f32 %v250, %v302
        %v304 = vpop.f32.mrb[0].mxu0
        %v305 = vpop.f32.mrb[0].mxu0
        %v306 = vpop.f32.mrb[0].mxu0
        %307 = vdwg.mxu0
        %vm308 = vcmp.gt.f32.partialorder %v303, 0.0
        %v309 = vmul.f32 %v303, 0.2
        %v310 = vsel %vm308, %v303, %v309
        %311 = vst [vmem:[%s234] sm:$0xff] %v310
        %s312 = sand.u32 %s123, 1
        %s313 = scalar_lea.sflag [#allocation6], %s312
        %s314 = sand.u32 %s123, 1
        %s315 = smul.addr %s314, 8
        %s316 = scalar_lea.vmem [#allocation9], %s315
        // Predicated region
        $region41: #{tpu_custom_call.1} parent=31 // pred_check
          %p317 = pneg %p133
        $region42: #{tpu_custom_call.1} parent=31 // pred_check_branch
          %319 = sbr.rel (%p317) target = $region44
        $region43: #{tpu_custom_call.1} parent=31 // pred_region
          %s321 = ssub.s32 128, 128
          %322 = vsyncadd %s313, %s321
          %s323 = sadd.s32 %s28, %s27
          %s324 = smul.addr %s323, 128
          %s325 = scalar_lea.hbm %s4, %s324
          %s327 = sshll.u32 %s316, 4
          %s328 = int_to_ptr.vmem [resolvable:$true] %s327
          %330 = dma.vmem_to_hbm [thread:$0]  %s328, 128, %s325, %s313
        $region44: #{tpu_custom_call.1} parent=31 // pred_fallthru
          _
      $region32: #{tpu_custom_call.1} parent=5 // pred_fallthru
        _
      %p331 = scmp.le.s32.totalorder 2, %s18
      // Predicated region
      $region45: #{tpu_custom_call.1} parent=5 // pred_check
        %p332 = pneg %p331
      $region46: #{tpu_custom_call.1} parent=5 // pred_check_branch
        %334 = sbr.rel (%p332) target = $region48
      $region47: #{tpu_custom_call.1} parent=5 // pred_region
        %s335 = ssub.s32 %s18, 2
        // Predicated region
        $region49: #{tpu_custom_call.1} parent=47 // pred_check
          %p336 = pneg %p139
        $region50: #{tpu_custom_call.1} parent=47 // pred_check_branch
          %338 = sbr.rel (%p336) target = $region52
        $region51: #{tpu_custom_call.1} parent=47 // pred_region
          %s339 = sand.u32 %s124, 1
          %s340 = scalar_lea.sflag [#allocation6], %s339
          %s341 = sand.u32 %s124, 1
          %s342 = smul.addr %s341, 8
          %s343 = scalar_lea.vmem [#allocation9], %s342
          %344 = dma.done %s340, 128
        $region52: #{tpu_custom_call.1} parent=47 // pred_fallthru
          _
      $region48: #{tpu_custom_call.1} parent=5 // pred_fallthru
        _
    $region6: #{tpu_custom_call.1} parent=1 // loop_footer
      %s22 = sadd.s32 1, %s18
    $region7: #{tpu_custom_call.1} parent=1 // loop_footer_branch
      %17 = sbr.rel target = $region3
    $region8: #{tpu_custom_call.1} parent=1 // loop_exit
      _
    %345 = vsyncpa [#allocation5], 1
    %s346 = scalar_lea.sflag [#allocation5], 1
    %347 = vsyncpa %s346, 1
    %348 = vsyncpa [#allocation8], 1
    %349 = vsyncpa [#allocation6], 1
    %s350 = scalar_lea.sflag [#allocation6], 1
    %351 = vsyncpa %s350, 1

</llo_original>
